<compile_context>
chip_gen: v5e
topology: v5e:2x2
jax: 0.10.0
libtpu: 0.0.40
codegen_flags: <defaults>
</compile_context>

<pallas_src>
import functools

import jax
import jax.numpy as jnp
from jax.experimental import pallas as pl
from jax.experimental.pallas import tpu as pltpu


def _round_up(x, m):
    return (x + m - 1) // m * m


def _policy_kernel(s_ref, p_ref, out_ref, *, obs, W, W2, A, r2, r3):
    # Static, aligned slices of the packed (rows, 128) parameter buffer.
    w1 = p_ref[0:W, 0:obs]                 # (W,  obs)  fc1 weight^T
    b1 = p_ref[0:W, obs:obs + 1]           # (W,  1)    fc1 bias (column)
    w2 = p_ref[r2:r2 + W2, 0:W]            # (W2, W)    fc2 weight^T
    b2 = p_ref[r2:r2 + W2, W:W + 1]        # (W2, 1)
    wh = p_ref[r3:r3 + 2 * A, 0:W2]        # (2A, W2)   fused fc5|fc6 weight^T
    bh = p_ref[r3:r3 + 2 * A, W2:W2 + 1]   # (2A, 1)

    s = s_ref[...]                         # (obs, TB)  batch on the 128-lane axis

    # fc1 + relu, fc2 (+ Identity bn2) + relu — all (features, TB), lane-dense.
    h1 = jnp.maximum(jnp.dot(w1, s, preferred_element_type=jnp.float32) + b1, 0.0)
    h2 = jnp.maximum(jnp.dot(w2, h1, preferred_element_type=jnp.float32) + b2, 0.0)

    # Fused head: rows [0, A) -> mu (tanh), rows [A, 2A) -> std (sigmoid).
    head = jnp.dot(wh, h2, preferred_element_type=jnp.float32) + bh   # (2A, TB)
    out_ref[0:A, :] = jnp.tanh(head[0:A, :])
    # sigmoid(x) = 0.5 * (1 + tanh(x / 2)): one tanh-class EUP op on this half only,
    # no iota/select, no wasted out-of-branch lanes.
    out_ref[A:2 * A, :] = 0.5 * jnp.tanh(0.5 * head[A:2 * A, :]) + 0.5


def pack_params(params):
    """Pack weights/biases (transposed, bias as an extra column) into one
    (rows, 128) f32 buffer: single parameter DMA, 8-row-aligned segments,
    128-lane width so every kernel slice is an aligned view.  Call ONCE and
    reuse the result across forward calls (hoisted out of the jitted path)."""
    obs, W = params["w1"].shape
    W2 = params["w2"].shape[1]
    A = params["w5"].shape[1]
    width = 128
    assert max(obs, W, W2, 2 * A) + 1 <= width, "layer wider than 128 needs a wider pack"

    def seg(w, b):
        # w: (fan_in, fan_out), b: (1, fan_out) -> (round8(fan_out), width)
        blk = jnp.concatenate([w.T, b.T], axis=1)          # (fan_out, fan_in + 1)
        return jnp.pad(blk, ((0, _round_up(blk.shape[0], 8) - blk.shape[0]),
                             (0, width - blk.shape[1])))

    w_head = jnp.concatenate([params["w5"], params["w6"]], axis=1)   # (W2, 2A)
    b_head = jnp.concatenate([params["b5"], params["b6"]], axis=1)   # (1, 2A)

    packed = jnp.concatenate([
        seg(params["w1"], params["b1"]),   # rows [0, r2)
        seg(params["w2"], params["b2"]),   # rows [r2, r3)
        seg(w_head, b_head),               # rows [r3, r3 + round8(2A))
    ], axis=0)
    r2 = _round_up(W, 8)
    r3 = r2 + _round_up(W2, 8)
    dims = (obs, W, W2, A, r2, r3)
    return packed, dims


def stochastic_policy_forward(s, packed, dims):
    """s: (B, obs_count) f32; packed/dims from pack_params.
    Returns (mu, std), each (B, action_count)."""
    obs, W, W2, A, r2, r3 = dims
    B = s.shape[0]

    # Batch tile: 128-aligned (lane axis), large enough to amortize the per-step
    # pipeline overhead; when more than one step is needed, size the tile so the
    # grid keeps >= 2 "parallel" steps (lets v7x's two TensorCores split the work).
    TB_CAP = 2048
    b128 = _round_up(B, 128)
    n_steps = max(1, -(-b128 // TB_CAP))
    TB = _round_up(-(-b128 // n_steps), 128)
    Bp = TB * n_steps

    # Lane-dense (batch-in-lanes) input: (obs, Bp).
    s_t = jnp.pad(s, ((0, Bp - B), (0, 0))).T

    kernel = functools.partial(_policy_kernel, obs=obs, W=W, W2=W2, A=A, r2=r2, r3=r3)

    out = pl.pallas_call(
        kernel,
        out_shape=jax.ShapeDtypeStruct((2 * A, Bp), jnp.float32),
        grid=(n_steps,),
        in_specs=[
            pl.BlockSpec((obs, TB), lambda i: (0, i)),        # batch tile of s^T
            pl.BlockSpec(packed.shape, lambda i: (0, 0)),     # params, resident
        ],
        out_specs=pl.BlockSpec((2 * A, TB), lambda i: (0, i)),
        compiler_params=pltpu.CompilerParams(
            dimension_semantics=("parallel",)),               # batch axis -> both TCs on v7x
    )(s_t, packed)

    mu = out[0:A, 0:B].T
    std = out[A:2 * A, 0:B].T
    return mu, std


def init_params(key, net_width, obs_count, action_count):
    """Deterministic synthetic init (PyTorch-Linear-style uniform bounds)."""
    def linear(key, fan_in, fan_out):
        kw, kb = jax.random.split(key)
        bound = 1.0 / jnp.sqrt(fan_in)
        w = jax.random.uniform(kw, (fan_in, fan_out), jnp.float32, -bound, bound)
        b = jax.random.uniform(kb, (1, fan_out), jnp.float32, -bound, bound)
        return w, b

    k1, k2, k5, k6 = jax.random.split(key, 4)
    w1, b1 = linear(k1, obs_count, net_width)
    w2, b2 = linear(k2, net_width, net_width // 2)
    w5, b5 = linear(k5, net_width // 2, action_count)
    w6, b6 = linear(k6, net_width // 2, action_count)
    # fc3/fc4/bn* exist in __init__ but are unused in forward; omitted here.
    return dict(w1=w1, b1=b1, w2=w2, b2=b2, w5=w5, b5=b5, w6=w6, b6=b6)


def _reference(s, p):
    x = jnp.maximum(s @ p["w1"] + p["b1"], 0.0)
    x = jnp.maximum(x @ p["w2"] + p["b2"], 0.0)
    mu = jnp.tanh(x @ p["w5"] + p["b5"])
    std = jax.nn.sigmoid(x @ p["w6"] + p["b6"])
    return mu, std


if __name__ == "__main__":
    net_width = 64
    obs_count = 32
    action_count = 8

    key = jax.random.PRNGKey(0)
    k_s, k_p, k_s2, k_s3 = jax.random.split(key, 4)
    params = init_params(k_p, net_width, obs_count, action_count)

    # Pack once, reuse across calls (hoisted out of the jitted forward path).
    packed, dims = pack_params(params)
    fwd = jax.jit(stochastic_policy_forward, static_argnames=("dims",))

    # Small-batch correctness check (single grid step).
    batch = 8
    s = jax.random.normal(k_s, (batch, obs_count), jnp.float32)
    mu, std = fwd(s, packed, dims=dims)
    jax.block_until_ready((mu, std))
    mu_ref, std_ref = _reference(s, params)
    assert mu.shape == (batch, action_count) and std.shape == (batch, action_count)
    assert jnp.allclose(mu, mu_ref, atol=1e-5, rtol=1e-5)
    assert jnp.allclose(std, std_ref, atol=1e-5, rtol=1e-5)

    # Non-multiple-of-128 batch exercises the lane padding (still one grid step).
    batch2 = 200
    s2 = jax.random.normal(k_s2, (batch2, obs_count), jnp.float32)
    mu2, std2 = fwd(s2, packed, dims=dims)
    jax.block_until_ready((mu2, std2))
    mu2_ref, std2_ref = _reference(s2, params)
    assert mu2.shape == (batch2, action_count) and std2.shape == (batch2, action_count)
    assert jnp.allclose(mu2, mu2_ref, atol=1e-5, rtol=1e-5)
    assert jnp.allclose(std2, std2_ref, atol=1e-5, rtol=1e-5)

    # Large batch exercises the multi-step parallel grid (>= 2 tiles).
    batch3 = 2500
    s3 = jax.random.normal(k_s3, (batch3, obs_count), jnp.float32)
    mu3, std3 = fwd(s3, packed, dims=dims)
    jax.block_until_ready((mu3, std3))
    mu3_ref, std3_ref = _reference(s3, params)
    assert mu3.shape == (batch3, action_count) and std3.shape == (batch3, action_count)
    assert jnp.allclose(mu3, mu3_ref, atol=1e-5, rtol=1e-5)
    assert jnp.allclose(std3, std3_ref, atol=1e-5, rtol=1e-5)

    print("KERNEL_OK")
</pallas_src>

<mosaic_0001>
module attributes {stable_mosaic.version = 11 : i64} {
  func.func @_policy_kernel(%arg0: i32, %arg1: memref<32x128xf32, #tpu.memory_space<vmem>>, %arg2: memref<112x128xf32, #tpu.memory_space<vmem>>, %arg3: memref<16x128xf32, #tpu.memory_space<vmem>>) attributes {dimension_semantics = [#tpu.dimension_semantics<parallel>], iteration_bounds = array<i64: 1>, scalar_prefetch = 0 : i64, scratch_operands = 0 : i64, tpu.core_type = #tpu.core_type<tc>, window_params = [{transform_indices = @transform_0, window_bounds = array<i64: 32, 128>}, {pipeline_mode = #tpu.pipeline_mode<synchronous>, transform_indices = @transform_1, window_bounds = array<i64: 112, 128>}, {transform_indices = @transform_2, window_bounds = array<i64: 16, 128>}]} {
    %c0 = arith.constant 0 : index
    %c0_0 = arith.constant 0 : index
    %0 = vector.load %arg2[%c0, %c0_0] : memref<112x128xf32, #tpu.memory_space<vmem>>, vector<64x32xf32>
    %c0_1 = arith.constant 0 : index
    %c32 = arith.constant 32 : index
    %1 = vector.load %arg2[%c0_1, %c32] : memref<112x128xf32, #tpu.memory_space<vmem>>, vector<64x1xf32>
    %c64 = arith.constant 64 : index
    %c0_2 = arith.constant 0 : index
    %2 = vector.load %arg2[%c64, %c0_2] : memref<112x128xf32, #tpu.memory_space<vmem>>, vector<32x64xf32>
    %c64_3 = arith.constant 64 : index
    %c64_4 = arith.constant 64 : index
    %3 = vector.load %arg2[%c64_3, %c64_4] : memref<112x128xf32, #tpu.memory_space<vmem>>, vector<32x1xf32>
    %c96 = arith.constant 96 : index
    %c0_5 = arith.constant 0 : index
    %4 = vector.load %arg2[%c96, %c0_5] : memref<112x128xf32, #tpu.memory_space<vmem>>, vector<16x32xf32>
    %c96_6 = arith.constant 96 : index
    %c32_7 = arith.constant 32 : index
    %5 = vector.load %arg2[%c96_6, %c32_7] : memref<112x128xf32, #tpu.memory_space<vmem>>, vector<16x1xf32>
    %c0_8 = arith.constant 0 : index
    %c0_9 = arith.constant 0 : index
    %6 = vector.load %arg1[%c0_8, %c0_9] : memref<32x128xf32, #tpu.memory_space<vmem>>, vector<32x128xf32>
    %cst = arith.constant dense<0.000000e+00> : vector<64x128xf32>
    %7 = tpu.matmul %0, %6, %cst {dimension_numbers = #tpu.dot_dimension_numbers<[1], [0], [0], [1], [0, 0, 1, 1], [], []>} : vector<64x32xf32>, vector<32x128xf32>, vector<64x128xf32> -> vector<64x128xf32>
    %8 = vector.broadcast %1 : vector<64x1xf32> to vector<64x128xf32>
    %9 = arith.addf %7, %8 : vector<64x128xf32>
    %cst_10 = arith.constant 0.000000e+00 : f32
    %10 = vector.broadcast %cst_10 : f32 to vector<64x128xf32>
    %11 = arith.maximumf %9, %10 : vector<64x128xf32>
    %cst_11 = arith.constant dense<0.000000e+00> : vector<32x128xf32>
    %12 = tpu.matmul %2, %11, %cst_11 {dimension_numbers = #tpu.dot_dimension_numbers<[1], [0], [0], [1], [0, 0, 1, 1], [], []>} : vector<32x64xf32>, vector<64x128xf32>, vector<32x128xf32> -> vector<32x128xf32>
    %13 = vector.broadcast %3 : vector<32x1xf32> to vector<32x128xf32>
    %14 = arith.addf %12, %13 : vector<32x128xf32>
    %cst_12 = arith.constant 0.000000e+00 : f32
    %15 = vector.broadcast %cst_12 : f32 to vector<32x128xf32>
    %16 = arith.maximumf %14, %15 : vector<32x128xf32>
    %cst_13 = arith.constant dense<0.000000e+00> : vector<16x128xf32>
    %17 = tpu.matmul %4, %16, %cst_13 {dimension_numbers = #tpu.dot_dimension_numbers<[1], [0], [0], [1], [0, 0, 1, 1], [], []>} : vector<16x32xf32>, vector<32x128xf32>, vector<16x128xf32> -> vector<16x128xf32>
    %18 = vector.broadcast %5 : vector<16x1xf32> to vector<16x128xf32>
    %19 = arith.addf %17, %18 : vector<16x128xf32>
    %20 = vector.extract_strided_slice %19 {offsets = [0, 0], sizes = [8, 128], strides = [1, 1]} : vector<16x128xf32> to vector<8x128xf32>
    %21 = math.tanh %20 : vector<8x128xf32>
    %c0_14 = arith.constant 0 : index
    %c0_15 = arith.constant 0 : index
    %22 = vector.load %arg3[%c0_14, %c0_15] : memref<16x128xf32, #tpu.memory_space<vmem>>, vector<8x128xf32>
    tpu.vector_store %arg3[%c0_14, %c0_15], %21 {strides = array<i32>} : memref<16x128xf32, #tpu.memory_space<vmem>>, vector<8x128xf32>,
    %23 = vector.extract_strided_slice %19 {offsets = [8, 0], sizes = [8, 128], strides = [1, 1]} : vector<16x128xf32> to vector<8x128xf32>
    %cst_16 = arith.constant 5.000000e-01 : f32
    %24 = vector.broadcast %cst_16 : f32 to vector<8x128xf32>
    %25 = arith.mulf %24, %23 : vector<8x128xf32>
    %26 = math.tanh %25 : vector<8x128xf32>
    %cst_17 = arith.constant 5.000000e-01 : f32
    %27 = vector.broadcast %cst_17 : f32 to vector<8x128xf32>
    %28 = arith.mulf %27, %26 : vector<8x128xf32>
    %cst_18 = arith.constant 5.000000e-01 : f32
    %29 = vector.broadcast %cst_18 : f32 to vector<8x128xf32>
    %30 = arith.addf %28, %29 : vector<8x128xf32>
    %c8 = arith.constant 8 : index
    %c0_19 = arith.constant 0 : index
    %31 = vector.load %arg3[%c8, %c0_19] : memref<16x128xf32, #tpu.memory_space<vmem>>, vector<8x128xf32>
    tpu.vector_store %arg3[%c8, %c0_19], %30 {strides = array<i32>} : memref<16x128xf32, #tpu.memory_space<vmem>>, vector<8x128xf32>,
    return
  }
  func.func @transform_0(%arg0: i32) -> (i32, i32) {
    %c0_i32 = arith.constant 0 : i32
    %c0_i32_0 = arith.constant 0 : i32
    return %c0_i32, %arg0 : i32, i32
  }
  func.func @transform_1(%arg0: i32) -> (i32, i32) {
    %c0_i32 = arith.constant 0 : i32
    %c0_i32_0 = arith.constant 0 : i32
    %c0_i32_1 = arith.constant 0 : i32
    return %c0_i32, %c0_i32_0 : i32, i32
  }
  func.func @transform_2(%arg0: i32) -> (i32, i32) {
    %c0_i32 = arith.constant 0 : i32
    %c0_i32_0 = arith.constant 0 : i32
    return %c0_i32, %arg0 : i32, i32
  }
}

</mosaic_0001>

<llo_original>
// kernel: stochastic_policy_forward.1
$region0: #{stochastic_policy_forward.1}
  #allocation0 [shape = 'u32[]', space=smem, size = 0x4, offset = 0x4, fixed_abs, tag = 'smem constant byte address 0x4 - core index']
  #allocation1 [shape = 'u32[72,128]{1,0:T(1,128)}', space=vmem, size = 0x9000, scoped, tag = 'internal scratch']
  %s0 = inlined_call_operand.vmem [shape: f32[32,128], index: 0, kind: input, shape index: {}]
  %s1 = inlined_call_operand.hbm [shape: f32[112,128], index: 1, kind: input, shape index: {}]
  %s2 = inlined_call_operand.vmem [shape: f32[16,128], index: 2, kind: output, shape index: {}]
  %s3 = sld [smem:[#allocation0]]
  $region22: #{stochastic_policy_forward.1} parent=0
    _
  %s5 = ssub.s32 1, %s3
  %s6 = scalar_select 0, %s5, %s3
  $region1: #{stochastic_policy_forward.1} parent=0
    #allocation2 [shape = 'u8[57344]{0}', space=vmem, size = 0xe000, scoped, tag = 'input window, operand 1, single buffered']
    #allocation3 [shape = 's32[1]{0}', space=sflag, size = 0x4, scoped, tag = 'scoped memory for stochastic_policy_forward.1']
    %7 = vsyncpa [#allocation3], 0
    // Predicated region
    $region2: #{stochastic_policy_forward.1} parent=1 // pred_check
      _
    $region3: #{stochastic_policy_forward.1} parent=1 // pred_check_branch
      %9 = sbr.rel (0) target = $region5
    $region4: #{stochastic_policy_forward.1} parent=1 // pred_region
      _
    $region5: #{stochastic_policy_forward.1} parent=1 // pred_fallthru
      _
    // Predicated region
    $region6: #{stochastic_policy_forward.1} parent=1 // pred_check
      _
    $region7: #{stochastic_policy_forward.1} parent=1 // pred_check_branch
      %11 = sbr.rel (0) target = $region9
    $region8: #{stochastic_policy_forward.1} parent=1 // pred_region
      %13 = vsyncadd [#allocation3], 0
      %s14 = sshll.u32 %s1, 4
      %s15 = int_to_ptr.hbm [resolvable:$true] %s14
      %s16 = sshll.u32 [#allocation2], 4
      %s17 = int_to_ptr.vmem [resolvable:$true] %s16
      %22 = dma.hbm_to_vmem [thread:$0]  %s15, 1792, %s17, [#allocation3], 128, 128, 8
    $region9: #{stochastic_policy_forward.1} parent=1 // pred_fallthru
      _
    // Predicated region
    $region10: #{stochastic_policy_forward.1} parent=1 // pred_check
      _
    $region11: #{stochastic_policy_forward.1} parent=1 // pred_check_branch
      %24 = sbr.rel (0) target = $region13
    $region12: #{stochastic_policy_forward.1} parent=1 // pred_region
      %26 = dma.done [#allocation3], 1792
    $region13: #{stochastic_policy_forward.1} parent=1 // pred_fallthru
      _
    %v27 = vld [vmem:[#allocation2] sm:$0xff]
    %v28 = vld [vmem:[#allocation2 + $0x8] sm:$0xff]
    %v29 = vld [vmem:[#allocation2 + $0x10] sm:$0xff]
    %v30 = vld [vmem:[#allocation2 + $0x18] sm:$0xff]
    %v31 = vld [vmem:[#allocation2 + $0x20] sm:$0xff]
    %v32 = vld [vmem:[#allocation2 + $0x28] sm:$0xff]
    %v33 = vld [vmem:[#allocation2 + $0x30] sm:$0xff]
    %v34 = vld [vmem:[#allocation2 + $0x38] sm:$0xff]
    %v35 = vld [vmem:[#allocation2 + $0x40] sm:$0xff]
    %v36 = vld [vmem:[#allocation2 + $0x48] sm:$0xff]
    %v37 = vld [vmem:[#allocation2 + $0x50] sm:$0xff]
    %v38 = vld [vmem:[#allocation2 + $0x58] sm:$0xff]
    %v39 = vld [vmem:[#allocation2 + $0x60] sm:$0xff]
    %v40 = vld [vmem:[#allocation2 + $0x68] sm:$0xff]
    %v41 = vld [vmem:[%s0] sm:$0xff]
    %v42 = vld [vmem:[%s0 + $0x8] sm:$0xff]
    %v43 = vld [vmem:[%s0 + $0x10] sm:$0xff]
    %v44 = vld [vmem:[%s0 + $0x18] sm:$0xff]
    %46 = vset.pattern.permute.xlu0 32
    %47 = vperm.xlu0 %46, %v27
    %v48 = vpop.permute.xlu0 %47
    %51 = vset.pattern.permute.xlu0 32
    %52 = vperm.xlu0 %51, %v28
    %v53 = vpop.permute.xlu0 %52
    %56 = vset.pattern.permute.xlu0 32
    %57 = vperm.xlu0 %56, %v29
    %v58 = vpop.permute.xlu0 %57
    %61 = vset.pattern.permute.xlu0 32
    %62 = vperm.xlu0 %61, %v30
    %v63 = vpop.permute.xlu0 %62
    %66 = vset.pattern.permute.xlu0 32
    %67 = vperm.xlu0 %66, %v31
    %v68 = vpop.permute.xlu0 %67
    %71 = vset.pattern.permute.xlu0 32
    %72 = vperm.xlu0 %71, %v32
    %v73 = vpop.permute.xlu0 %72
    %76 = vset.pattern.permute.xlu0 32
    %77 = vperm.xlu0 %76, %v33
    %v78 = vpop.permute.xlu0 %77
    %81 = vset.pattern.permute.xlu0 32
    %82 = vperm.xlu0 %81, %v34
    %v83 = vpop.permute.xlu0 %82
    %vm85 = vcmask 261120
    %v86 = vsel %vm85, %v27, 0
    %v88 = vsel %vm85, %v28, 0
    %v90 = vsel %vm85, %v29, 0
    %v92 = vsel %vm85, %v30, 0
    %v94 = vsel %vm85, %v31, 0
    %v96 = vsel %vm85, %v32, 0
    %v98 = vsel %vm85, %v33, 0
    %v100 = vsel %vm85, %v34, 0
    %102 = vmatpush.msra.mxu0 0.0
    %103 = vmatpush.msra.mxu0 0.0
    %104 = vmatpush.msra.mxu0 0.0
    %105 = vmatpush.msra.mxu0 0.0
    %106 = vmatpush.msra.mxu0 0.0
    %107 = vmatpush.msra.mxu0 0.0
    %108 = vmatpush.msra.mxu0 0.0
    %109 = vmatpush.msra.mxu0 0.0
    %110 = vmatpush.msra.mxu0 0.0
    %111 = vmatpush.msra.mxu0 0.0
    %112 = vmatpush.msra.mxu0 0.0
    %113 = vmatpush.msra.mxu0 0.0
    %114 = vmatpush.msra.mxu0 %v44
    %115 = vmatpush.msra.mxu0 %v43
    %116 = vmatpush.msra.mxu0 %v42
    %117 = vmatpush.msra.mxu0 %v41
    %118 = vmatmul.f32.gmra.mxu0 %v86
    %v119 = vpop.f32.mrf.mxu0
    %v120 = vadd.f32 %v48, %v119
    %121 = vmatmul.f32.gmra.mxu0 %v88
    %v122 = vpop.f32.mrf.mxu0
    %v123 = vadd.f32 %v53, %v122
    %124 = vmatmul.f32.gmra.mxu0 %v90
    %v125 = vpop.f32.mrf.mxu0
    %v126 = vadd.f32 %v58, %v125
    %127 = vmatmul.f32.gmra.mxu0 %v92
    %v128 = vpop.f32.mrf.mxu0
    %v129 = vadd.f32 %v63, %v128
    %130 = vmatmul.f32.gmra.mxu0 %v94
    %v131 = vpop.f32.mrf.mxu0
    %v132 = vadd.f32 %v68, %v131
    %133 = vmatmul.f32.gmra.mxu0 %v96
    %v134 = vpop.f32.mrf.mxu0
    %v135 = vadd.f32 %v73, %v134
    %136 = vmatmul.f32.gmra.mxu0 %v98
    %v137 = vpop.f32.mrf.mxu0
    %v138 = vadd.f32 %v78, %v137
    %139 = vmatmul.f32.gmra.mxu0 %v100
    %v140 = vpop.f32.mrf.mxu0
    %v141 = vadd.f32 %v83, %v140
    %142 = vdwg.mxu0
    %v143 = vmax.f32 %v120, 0.0
    %v144 = vmax.f32 %v123, 0.0
    %v145 = vmax.f32 %v126, 0.0
    %v146 = vmax.f32 %v129, 0.0
    %v147 = vmax.f32 %v132, 0.0
    %v148 = vmax.f32 %v135, 0.0
    %v149 = vmax.f32 %v138, 0.0
    %v150 = vmax.f32 %v141, 0.0
    %152 = vset.pattern.permute.xlu0 64
    %153 = vperm.xlu0 %152, %v35
    %v154 = vpop.permute.xlu0 %153
    %157 = vset.pattern.permute.xlu0 64
    %158 = vperm.xlu0 %157, %v36
    %v159 = vpop.permute.xlu0 %158
    %162 = vset.pattern.permute.xlu0 64
    %163 = vperm.xlu0 %162, %v37
    %v164 = vpop.permute.xlu0 %163
    %167 = vset.pattern.permute.xlu0 64
    %168 = vperm.xlu0 %167, %v38
    %v169 = vpop.permute.xlu0 %168
    %vm171 = vcmask 523264
    %v172 = vsel %vm171, %v35, 0
    %v174 = vsel %vm171, %v36, 0
    %v176 = vsel %vm171, %v37, 0
    %v178 = vsel %vm171, %v38, 0
    %180 = vmatpush.msra.mxu0 0.0
    %181 = vmatpush.msra.mxu0 0.0
    %182 = vmatpush.msra.mxu0 0.0
    %183 = vmatpush.msra.mxu0 0.0
    %184 = vmatpush.msra.mxu0 0.0
    %185 = vmatpush.msra.mxu0 0.0
    %186 = vmatpush.msra.mxu0 0.0
    %187 = vmatpush.msra.mxu0 0.0
    %188 = vmatpush.msra.mxu0 %v150
    %189 = vmatpush.msra.mxu0 %v149
    %190 = vmatpush.msra.mxu0 %v148
    %191 = vmatpush.msra.mxu0 %v147
    %192 = vmatpush.msra.mxu0 %v146
    %193 = vmatpush.msra.mxu0 %v145
    %194 = vmatpush.msra.mxu0 %v144
    %195 = vmatpush.msra.mxu0 %v143
    %196 = vmatmul.f32.gmra.mxu0 %v172
    %v197 = vpop.f32.mrf.mxu0
    %v198 = vadd.f32 %v154, %v197
    %199 = vmatmul.f32.gmra.mxu0 %v174
    %v200 = vpop.f32.mrf.mxu0
    %v201 = vadd.f32 %v159, %v200
    %202 = vmatmul.f32.gmra.mxu0 %v176
    %v203 = vpop.f32.mrf.mxu0
    %v204 = vadd.f32 %v164, %v203
    %205 = vmatmul.f32.gmra.mxu0 %v178
    %v206 = vpop.f32.mrf.mxu0
    %v207 = vadd.f32 %v169, %v206
    %208 = vdwg.mxu0
    %v209 = vmax.f32 %v198, 0.0
    %v210 = vmax.f32 %v201, 0.0
    %v211 = vmax.f32 %v204, 0.0
    %v212 = vmax.f32 %v207, 0.0
    %214 = vset.pattern.permute.xlu0 32
    %215 = vperm.xlu0 %214, %v39
    %v216 = vpop.permute.xlu0 %215
    %219 = vset.pattern.permute.xlu0 32
    %220 = vperm.xlu0 %219, %v40
    %v221 = vpop.permute.xlu0 %220
    %v223 = vsel %vm85, %v39, 0
    %v225 = vsel %vm85, %v40, 0
    %227 = vmatpush.msra.mxu0 0.0
    %228 = vmatpush.msra.mxu0 0.0
    %229 = vmatpush.msra.mxu0 0.0
    %230 = vmatpush.msra.mxu0 0.0
    %231 = vmatpush.msra.mxu0 0.0
    %232 = vmatpush.msra.mxu0 0.0
    %233 = vmatpush.msra.mxu0 0.0
    %234 = vmatpush.msra.mxu0 0.0
    %235 = vmatpush.msra.mxu0 0.0
    %236 = vmatpush.msra.mxu0 0.0
    %237 = vmatpush.msra.mxu0 0.0
    %238 = vmatpush.msra.mxu0 0.0
    %239 = vmatpush.msra.mxu0 %v212
    %240 = vmatpush.msra.mxu0 %v211
    %241 = vmatpush.msra.mxu0 %v210
    %242 = vmatpush.msra.mxu0 %v209
    %243 = vmatmul.f32.gmra.mxu0 %v223
    %v244 = vpop.f32.mrf.mxu0
    %v245 = vadd.f32 %v216, %v244
    %246 = vmatmul.f32.gmra.mxu0 %v225
    %v247 = vpop.f32.mrf.mxu0
    %v248 = vadd.f32 %v221, %v247
    %249 = vdwg.mxu0
    %v250 = vtanh.pop %v245
    %251 = vst [vmem:[%s2] sm:$0xff] %v250
    %v252 = vmul.f32 %v248, 0.5
    %v253 = vtanh.pop %v252
    %v254 = vmul.f32 %v253, 0.5
    %v255 = vadd.f32 %v254, 0.5
    %256 = vst [vmem:[%s2 + $0x8] sm:$0xff] %v255
    // Predicated region
    $region14: #{stochastic_policy_forward.1} parent=1 // pred_check
      _
    $region15: #{stochastic_policy_forward.1} parent=1 // pred_check_branch
      %258 = sbr.rel (0) target = $region17
    $region16: #{stochastic_policy_forward.1} parent=1 // pred_region
      _
    $region17: #{stochastic_policy_forward.1} parent=1 // pred_fallthru
      _
    // Predicated region
    $region18: #{stochastic_policy_forward.1} parent=1 // pred_check
      _
    $region19: #{stochastic_policy_forward.1} parent=1 // pred_check_branch
      %260 = sbr.rel (0) target = $region21
    $region20: #{stochastic_policy_forward.1} parent=1 // pred_region
      _
    $region21: #{stochastic_policy_forward.1} parent=1 // pred_fallthru
      _
    %261 = vsyncpa [#allocation3], 1

</llo_original>
